<compile_context>
chip_gen: v6e
topology: v6e:2x2x1
jax: 0.10.0
libtpu: 0.0.40
codegen_flags: <defaults>
</compile_context>

<pallas_src>
import functools

import jax
import jax.numpy as jnp
from jax.experimental import pallas as pl
from jax.experimental.pallas import tpu as pltpu


_VMEM_LIMIT = 48 * 1024 * 1024     # raised scoped-VMEM limit; safe on v5e/v6e (128 MiB) & v7x (64 MiB)
_BLOCK_BUDGET = 10 * 1024 * 1024   # per input block; x2 for double buffering stays well under limit
_MAX_HW_TILE = 4096                # caps unrolled lane-chunk count (<= 32 chunks per step)


def _int_pow(x, n):
    """x ** n for static integer n >= 1, via exponentiation by squaring (VPU muls only)."""
    result = None
    base = x
    while n > 0:
        if n & 1:
            result = base if result is None else result * base
        n >>= 1
        if n:
            base = base * base
    return result


def _gd_kernel(x_ref, o_ref, acc_ref, *, p_int, p_float, p_is_inf, inv_hw, acc_w):
    """One (row-tile, hw-tile) grid step.

    x_ref  : (row_tile, hw_tile)  input slab (spatial flattened onto lanes)
    o_ref  : (row_tile, 1)        output, written on the last hw step
    acc_ref: (row_tile, acc_w)    f32 running lane-partial sum (or max)
    """
    hw_idx = pl.program_id(1)

    @pl.when(hw_idx == 0)
    def _init():
        if p_is_inf:
            acc_ref[...] = jnp.full_like(acc_ref, -jnp.inf)
        else:
            acc_ref[...] = jnp.zeros_like(acc_ref)

    x = x_ref[...]
    hw_tile = x.shape[-1]
    combine = jnp.maximum if p_is_inf else jnp.add

    def transform(c):
        # Elementwise map applied before the spatial reduction.
        if p_is_inf:
            return c                                    # max is exact in the native dtype
        c = c.astype(jnp.float32)
        if p_int is not None:
            return c if p_int == 1 else _int_pow(c, p_int)
        # Non-integer p: matches torch.pow (NaN for negative inputs).
        return jnp.exp(jnp.log(c) * p_float)

    if acc_w == 128:
        # Lane-partial accumulation: fold 128-wide lane chunks with VPU ops;
        # the single cross-lane (XLU) reduce is deferred to the finalize step.
        part = transform(x[:, :128])
        for ci in range(1, hw_tile // 128):
            part = combine(part, transform(x[:, ci * 128:(ci + 1) * 128]))
    else:
        # hw_tile is the full (non-128-divisible) spatial extent -> single step;
        # reduce across lanes once, directly.
        t = transform(x)
        if p_is_inf:
            part = t.max(axis=-1, keepdims=True)
        else:
            part = t.sum(axis=-1, keepdims=True)

    acc_ref[...] = combine(acc_ref[...], part.astype(jnp.float32))

    @pl.when(hw_idx == pl.num_programs(1) - 1)
    def _finalize():
        if p_is_inf:
            res = acc_ref[...].max(axis=-1, keepdims=True)
        else:
            mean = acc_ref[...].sum(axis=-1, keepdims=True) * inv_hw
            if p_int == 1:
                res = mean
            else:
                # sign(m) * |m| ** (1/p) via exp/log (|m| == 0 -> exp(-inf) == 0).
                root = jnp.exp(jnp.log(jnp.abs(mean)) * (1.0 / p_float))
                res = jnp.sign(mean) * root
        o_ref[...] = res.astype(o_ref.dtype)


def global_descriptor(x, p=1, *, row_tile=None, hw_tile=None, interpret=False):
    """Pallas GlobalDescriptor: x is NCHW [B, C, H, W] -> [B, C]."""
    assert x.ndim == 4, "the input tensor of GlobalDescriptor must be the shape of [B, C, H, W]"
    B, C, H, W = x.shape
    R, HW = B * C, H * W
    itemsize = jnp.dtype(x.dtype).itemsize

    # Free reshape: NCHW is contiguous over (h, w) per (b, c) row.
    x2 = x.reshape(R, HW)

    # ---- static p dispatch ----
    p_is_inf = (p == float("inf"))
    if p_is_inf:
        p_int, p_float = None, None
    else:
        pf = float(p)
        if pf.is_integer() and pf >= 1.0:
            p_int, p_float = int(pf), pf        # integer-valued float p (e.g. 3.0) -> VPU power path
        else:
            p_int, p_float = None, pf           # genuinely non-integer p -> exp/log path

    # ---- spatial (lane) tile ----
    if hw_tile is None:
        if HW % 128 == 0:
            hw_tile = min(HW, _MAX_HW_TILE)
            while HW % hw_tile:
                hw_tile -= 128
        else:
            hw_tile = HW                         # full extent required by the (8,128) rule
    assert HW % hw_tile == 0 and (hw_tile == HW or hw_tile % 128 == 0), "invalid hw_tile"

    # ---- row (sublane / parallel) tile: biggest divisor of R (multiple of 8)
    #      fitting the VMEM block budget, while keeping >= 2 parallel tiles.
    if row_tile is None:
        budget_rows = max(8, _BLOCK_BUDGET // (hw_tile * itemsize))
        divs = [d for d in range(8, R + 1, 8) if R % d == 0 and d <= budget_rows]
        if divs:
            multi = [d for d in divs if R // d >= 2]   # >= 2 tiles on the parallel axis (v7x: 2 TCs)
            row_tile = max(multi) if multi else max(divs)
        else:
            row_tile = 8 if (R >= 8 and R % 8 == 0) else R
    assert R % row_tile == 0 and (row_tile % 8 == 0 or row_tile == R), "invalid row_tile"

    acc_w = 128 if hw_tile % 128 == 0 else 1
    grid = (R // row_tile, HW // hw_tile)

    kernel = functools.partial(
        _gd_kernel,
        p_int=p_int, p_float=p_float, p_is_inf=p_is_inf,
        inv_hw=1.0 / float(HW), acc_w=acc_w)

    out = pl.pallas_call(
        kernel,
        out_shape=jax.ShapeDtypeStruct((R, 1), x.dtype),
        grid_spec=pltpu.PrefetchScalarGridSpec(
            num_scalar_prefetch=0,
            grid=grid,
            in_specs=[pl.BlockSpec((row_tile, hw_tile), lambda i, k: (i, k))],
            out_specs=pl.BlockSpec((row_tile, 1), lambda i, k: (i, 0)),
            scratch_shapes=[pltpu.VMEM((row_tile, acc_w), jnp.float32)],
        ),
        compiler_params=pltpu.CompilerParams(
            dimension_semantics=("parallel", "arbitrary"),
            vmem_limit_bytes=_VMEM_LIMIT),
        interpret=interpret,
    )(x2)

    return out.reshape(B, C)


def _ref_global_descriptor(x, p):
    if p == 1:
        return jnp.mean(x, axis=(-1, -2))
    if p == float("inf"):
        return jnp.max(x, axis=(-1, -2))
    m = jnp.mean(x ** p, axis=(-1, -2))
    return jnp.sign(m) * jnp.abs(m) ** (1.0 / p)


if __name__ == "__main__":
    key = jax.random.PRNGKey(0)

    # CNN-feature-map-like shape: channels lane/sublane friendly, 16x16 spatial
    # (H*W = 256 -> lane-partial accumulation path).
    B, C, H, W = 2, 256, 16, 16
    x = jax.random.normal(key, (B, C, H, W), jnp.float32)

    # All three module branches, plus the integer-valued-float p case (3.0 must
    # take the integer-power path and stay finite on negative activations).
    for p in (1, float("inf"), 3, 3.0):
        out = jax.block_until_ready(global_descriptor(x, p=p))
        ref = _ref_global_descriptor(x, p)
        assert out.shape == (B, C)
        assert jnp.allclose(out, ref, rtol=1e-4, atol=1e-4), f"mismatch for p={p}"

    # Force hw tiling so the multi-step accumulator (init / finalize) path runs.
    out = jax.block_until_ready(global_descriptor(x, p=3, hw_tile=128))
    assert jnp.allclose(out, _ref_global_descriptor(x, 3), rtol=1e-4, atol=1e-4)

    # Small 7x7 map (H*W not a multiple of 128 -> full-spatial block path),
    # positive activations so the genuinely non-integer p branch is well defined.
    x2 = jax.nn.softplus(jax.random.normal(jax.random.PRNGKey(0), (2, 64, 7, 7), jnp.float32))
    for p in (1, float("inf"), 2.5):
        out = jax.block_until_ready(global_descriptor(x2, p=p))
        ref = _ref_global_descriptor(x2, p)
        assert out.shape == (2, 64)
        assert jnp.allclose(out, ref, rtol=1e-4, atol=1e-4), f"mismatch for p={p} (7x7)"

    print("KERNEL_OK")
</pallas_src>

<mosaic_0001>
module attributes {stable_mosaic.version = 11 : i64} {
  func.func @_gd_kernel(%arg0: i32, %arg1: i32, %arg2: memref<256x256xf32, #tpu.memory_space<vmem>>, %arg3: memref<256x1xf32, #tpu.memory_space<vmem>>, %arg4: memref<256x128xf32, #tpu.memory_space<vmem>>) attributes {dimension_semantics = [#tpu.dimension_semantics<parallel>, #tpu.dimension_semantics<arbitrary>], iteration_bounds = array<i64: 2, 1>, scalar_prefetch = 0 : i64, scratch_operands = 1 : i64, tpu.core_type = #tpu.core_type<tc>, window_params = [{transform_indices = @transform_0, window_bounds = array<i64: 256, 256>}, {transform_indices = @transform_1, window_bounds = array<i64: 256, 1>}]} {
    %c0_i32 = arith.constant 0 : i32
    %0 = arith.cmpi eq, %arg1, %c0_i32 : i32
    %1 = arith.extui %0 : i1 to i32
    %c0_i32_0 = arith.constant 0 : i32
    %2 = arith.cmpi ne, %1, %c0_i32_0 : i32
    scf.if %2 {
      %cst = arith.constant 0.000000e+00 : f32
      %13 = vector.broadcast %cst : f32 to vector<256x128xf32>
      %c0_8 = arith.constant 0 : index
      %c0_9 = arith.constant 0 : index
      %14 = vector.load %arg4[%c0_8, %c0_9] : memref<256x128xf32, #tpu.memory_space<vmem>>, vector<256x128xf32>
      tpu.vector_store %arg4[%c0_8, %c0_9], %13 {strides = array<i32>} : memref<256x128xf32, #tpu.memory_space<vmem>>, vector<256x128xf32>,
    } else {
    }
    %c0 = arith.constant 0 : index
    %c0_1 = arith.constant 0 : index
    %3 = vector.load %arg2[%c0, %c0_1] : memref<256x256xf32, #tpu.memory_space<vmem>>, vector<256x256xf32>
    %4 = vector.extract_strided_slice %3 {offsets = [0, 0], sizes = [256, 128], strides = [1, 1]} : vector<256x256xf32> to vector<256x128xf32>
    %5 = vector.extract_strided_slice %3 {offsets = [0, 128], sizes = [256, 128], strides = [1, 1]} : vector<256x256xf32> to vector<256x128xf32>
    %6 = arith.addf %4, %5 : vector<256x128xf32>
    %c0_2 = arith.constant 0 : index
    %c0_3 = arith.constant 0 : index
    %7 = vector.load %arg4[%c0_2, %c0_3] : memref<256x128xf32, #tpu.memory_space<vmem>>, vector<256x128xf32>
    %8 = arith.addf %7, %6 : vector<256x128xf32>
    %c0_4 = arith.constant 0 : index
    %c0_5 = arith.constant 0 : index
    %9 = vector.load %arg4[%c0_4, %c0_5] : memref<256x128xf32, #tpu.memory_space<vmem>>, vector<256x128xf32>
    tpu.vector_store %arg4[%c0_4, %c0_5], %8 {strides = array<i32>} : memref<256x128xf32, #tpu.memory_space<vmem>>, vector<256x128xf32>,
    %c0_i32_6 = arith.constant 0 : i32
    %10 = arith.cmpi eq, %arg1, %c0_i32_6 : i32
    %11 = arith.extui %10 : i1 to i32
    %c0_i32_7 = arith.constant 0 : i32
    %12 = arith.cmpi ne, %11, %c0_i32_7 : i32
    scf.if %12 {
      %c0_8 = arith.constant 0 : index
      %c0_9 = arith.constant 0 : index
      %13 = vector.load %arg4[%c0_8, %c0_9] : memref<256x128xf32, #tpu.memory_space<vmem>>, vector<256x128xf32>
      %cst = arith.constant dense<0.000000e+00> : vector<256xf32>
      %14 = vector.multi_reduction <add>, %13, %cst [1] : vector<256x128xf32> to vector<256xf32>
      %15 = vector.shape_cast %14 : vector<256xf32> to vector<256x1xf32>
      %cst_10 = arith.constant 3.906250e-03 : f32
      %16 = vector.broadcast %cst_10 : f32 to vector<256x1xf32>
      %17 = arith.mulf %15, %16 : vector<256x1xf32>
      %c0_11 = arith.constant 0 : index
      %c0_12 = arith.constant 0 : index
      %18 = vector.load %arg3[%c0_11, %c0_12] : memref<256x1xf32, #tpu.memory_space<vmem>>, vector<256x1xf32>
      tpu.vector_store %arg3[%c0_11, %c0_12], %17 {strides = array<i32>} : memref<256x1xf32, #tpu.memory_space<vmem>>, vector<256x1xf32>,
    } else {
    }
    return
  }
  func.func @transform_0(%arg0: i32, %arg1: i32) -> (i32, i32) {
    %c0_i32 = arith.constant 0 : i32
    return %arg0, %arg1 : i32, i32
  }
  func.func @transform_1(%arg0: i32, %arg1: i32) -> (i32, i32) {
    %c0_i32 = arith.constant 0 : i32
    %c0_i32_0 = arith.constant 0 : i32
    return %arg0, %c0_i32 : i32, i32
  }
}

</mosaic_0001>

<llo_original>
// kernel: tpu_custom_call.1
$region0: #{tpu_custom_call.1}
  #allocation0 [shape = 'u32[]', space=smem, size = 0x4, offset = 0x4, fixed_abs, tag = 'smem constant byte address 0x4 - core index']
  #allocation1 [shape = 'u32[144,128]{1,0:T(1,128)}', space=vmem, size = 0x12000, scoped, tag = 'internal scratch']
  #allocation2 [shape = 'f32[256,128]{1,0:T(8,128)}', space=vmem, size = 0x20000, scoped, tag = 'scratch operand']
  %s0 = inlined_call_operand.hbm [shape: f32[512,256], index: 0, kind: input, shape index: {}]
  %s1 = inlined_call_operand.vmem [shape: f32[512,1], index: 1, kind: output, shape index: {}]
  %s2 = sld [smem:[#allocation0]]
  $region49: #{tpu_custom_call.1} parent=0
    _
  %s4 = ssub.s32 1, %s2
  %s5 = scalar_select 0, %s4, %s2
  $region1: #{tpu_custom_call.1} parent=0
    #allocation3 [shape = 'u8[524288]{0}', space=vmem, size = 0x80000, scoped, tag = 'input window, operand 0']
    #allocation4 [shape = 's32[2]{0}', space=sflag, size = 0x8, scoped, tag = 'scoped memory for tpu_custom_call.1']
    %6 = vsyncpa [#allocation4], 0
    %s7 = scalar_lea.sflag [#allocation4], 1
    %8 = vsyncpa %s7, 0
    loop: start=0, step=1, limit=4
    $region2: #{tpu_custom_call.1} parent=1 // loop_pre_header
      _
    $region3: #{tpu_custom_call.1} parent=1 // loop_header
      %s10 = sphi 0, %s14
      %p11 = scmp.ge.s32.totalorder %s10, 4
      %s17 = sphi 0, %s29
      %s18 = sphi 0, %s25
      %s19 = sphi 0, %s17
      %s20 = sphi 0, %s18
      %s21 = sphi 0, %s19
      %s22 = sphi 0, %s20
      %s34 = sphi 0, %s36
      %s37 = sphi 0, %s34
      %s38 = sphi 0, %s37
      %s54 = sphi 0, %s38
      %s60 = sphi 0, %s62
      %s63 = sphi 0, %s60
      %s64 = sphi 0, %s63
      %s80 = sphi 0, %s64
    $region4: #{tpu_custom_call.1} parent=1 // loop_header_branch
      %13 = sbr.rel (%p11) target = $region8
    $region5: #{tpu_custom_call.1} parent=1 // loop_body
      %s15 = ssub.s32 %s10, 1
      %s16 = ssub.s32 %s10, 2
      %s23 = sadd.s32 1, %s18
      %p24 = scmp.ge.s32.totalorder %s23, 1
      %s25 = scalar_select %p24, 0, %s23
      %s26 = sadd.s32 1, %s17
      %s27 = scalar_select %p24, %s26, %s17
      %p28 = scmp.ge.s32.totalorder %s27, 2
      %s29 = scalar_select %p28, 0, %s27
      %s30 = ssub.s32 %s17, %s29
      %s31 = ssub.s32 %s18, %s25
      %s32 = sor.u32 %s30, %s31
      %p33 = scmp.eq.s32.totalorder %s32, 0
      %s35 = sadd.s32 %s34, 1
      %s36 = scalar_select %p33, %s34, %s35
      %p39 = pneg %p33
      %p40 = scmp.eq.s32.totalorder %s10, 1
      %p41 = por %p39, %p40
      %p42 = scmp.ne.s32.totalorder %s34, %s37
      %p43 = scmp.eq.s32.totalorder %s10, 0
      %p44 = por %p42, %p43
      %p45 = scmp.ne.s32.totalorder %s34, %s37
      %p46 = scmp.eq.s32.totalorder %s15, 1
      %p47 = por %p45, %p46
      %p48 = scmp.ne.s32.totalorder %s37, %s38
      %p49 = scmp.eq.s32.totalorder %s15, 0
      %p50 = por %p48, %p49
      %p51 = scmp.ne.s32.totalorder %s37, %s38
      %p52 = scmp.eq.s32.totalorder %s16, 1
      %p53 = por %p51, %p52
      %p55 = scmp.ne.s32.totalorder %s38, %s54
      %p56 = scmp.eq.s32.totalorder %s16, 0
      %p57 = por %p55, %p56
      %s58 = ssub.s32 %s17, %s29
      %p59 = scmp.eq.s32.totalorder %s58, 0
      %s61 = sadd.s32 %s60, 1
      %s62 = scalar_select %p59, %s60, %s61
      %p65 = pneg %p59
      %p66 = scmp.eq.s32.totalorder %s10, 1
      %p67 = por %p65, %p66
      %p68 = scmp.ne.s32.totalorder %s60, %s63
      %p69 = scmp.eq.s32.totalorder %s10, 0
      %p70 = por %p68, %p69
      %p71 = scmp.ne.s32.totalorder %s60, %s63
      %p72 = scmp.eq.s32.totalorder %s15, 1
      %p73 = por %p71, %p72
      %p74 = scmp.ne.s32.totalorder %s63, %s64
      %p75 = scmp.eq.s32.totalorder %s15, 0
      %p76 = por %p74, %p75
      %p77 = scmp.ne.s32.totalorder %s63, %s64
      %p78 = scmp.eq.s32.totalorder %s16, 1
      %p79 = por %p77, %p78
      %p81 = scmp.ne.s32.totalorder %s64, %s80
      %p82 = scmp.eq.s32.totalorder %s16, 0
      %p83 = por %p81, %p82
      %p84 = scmp.le.s32.totalorder 1, %s10
      %p85 = scmp.lt.s32.totalorder %s10, 3
      %p86 = pnand %p84, %p85
      %p87 = pneg %p86
      // Predicated region
      $region9: #{tpu_custom_call.1} parent=5 // pred_check
        _
      $region10: #{tpu_custom_call.1} parent=5 // pred_check_branch
        %89 = sbr.rel (%p86) target = $region12
      $region11: #{tpu_custom_call.1} parent=5 // pred_region
        %s90 = ssub.s32 %s10, 1
      $region12: #{tpu_custom_call.1} parent=5 // pred_fallthru
        _
      %p91 = scmp.lt.s32.totalorder %s10, 2
      // Predicated region
      $region13: #{tpu_custom_call.1} parent=5 // pred_check
        %p92 = pneg %p91
      $region14: #{tpu_custom_call.1} parent=5 // pred_check_branch
        %94 = sbr.rel (%p92) target = $region16
      $region15: #{tpu_custom_call.1} parent=5 // pred_region
        // Predicated region
        $region17: #{tpu_custom_call.1} parent=15 // pred_check
          %p95 = pneg %p44
        $region18: #{tpu_custom_call.1} parent=15 // pred_check_branch
          %97 = sbr.rel (%p95) target = $region20
        $region19: #{tpu_custom_call.1} parent=15 // pred_region
          %s98 = sand.u32 %s34, 1
          %s99 = scalar_lea.sflag [#allocation4], %s98
          %s100 = sand.u32 %s34, 1
          %s101 = smul.addr %s100, 512
          %s102 = scalar_lea.vmem [#allocation3], %s101
          %s103 = smul.u32 32, %s17
          %s104 = smul.u32 2, %s18
          %s106 = ssub.s32 8192, 8192
          %107 = vsyncadd %s99, %s106
          %s108 = smul.addr %s103, 2
          %s109 = sadd.s32 %s104, %s108
          %s110 = smul.addr %s109, 128
          %s111 = scalar_lea.hbm %s0, %s110
          %s112 = sshll.u32 %s102, 4
          %s113 = int_to_ptr.vmem [resolvable:$true] %s112
          %118 = dma.hbm_to_vmem [thread:$0]  %s111, 8192, %s113, %s99, 256, 256, 16
        $region20: #{tpu_custom_call.1} parent=15 // pred_fallthru
          _
      $region16: #{tpu_custom_call.1} parent=5 // pred_fallthru
        _
      %p119 = scmp.le.s32.totalorder 1, %s10
      %p120 = scmp.lt.s32.totalorder %s10, 3
      %p121 = pnand %p119, %p120
      %p122 = pneg %p121
      // Predicated region
      $region21: #{tpu_custom_call.1} parent=5 // pred_check
        _
      $region22: #{tpu_custom_call.1} parent=5 // pred_check_branch
        %124 = sbr.rel (%p121) target = $region24
      $region23: #{tpu_custom_call.1} parent=5 // pred_region
        %s125 = ssub.s32 %s10, 1
        %s126 = sand.u32 %s37, 1
        %s127 = scalar_lea.sflag [#allocation4], %s126
        %s128 = sand.u32 %s37, 1
        %s129 = smul.addr %s128, 512
        %s130 = scalar_lea.vmem [#allocation3], %s129
        // Predicated region
        $region25: #{tpu_custom_call.1} parent=23 // pred_check
          %p131 = pneg %p50
        $region26: #{tpu_custom_call.1} parent=23 // pred_check_branch
          %133 = sbr.rel (%p131) target = $region28
        $region27: #{tpu_custom_call.1} parent=23 // pred_region
          %134 = dma.done %s127, 8192
        $region28: #{tpu_custom_call.1} parent=23 // pred_fallthru
          _
        %s135 = sand.u32 %s37, 1
        %s136 = scalar_lea.sflag [#allocation4], %s135
        %s137 = sand.u32 %s37, 1
        %s138 = smul.addr %s137, 512
        %s139 = scalar_lea.vmem [#allocation3], %s138
        %p140 = pneg %p50
        %p141 = pneg %p47
        %p142 = pneg %p76
        %p143 = pneg %p73
        %s144 = smul.u32 32, %s19
        %p145 = scmp.lt.s32.totalorder %s144, 63
        %s146 = scalar_select %p145, %s144, 63
        %s147 = smul.addr %s146, 8
        %s148 = scalar_lea.vmem %s1, %s147
        %s149 = smul.u32 32, %s19
        %s150 = smul.u32 2, %s20
        %s151 = smul.u32 32, %s19
        %p152 = scmp.lt.s32.totalorder %s151, 63
        %s153 = scalar_select %p152, %s151, 63
        %s154 = smul.addr %s153, 8
        %s155 = scalar_lea.vmem %s1, %s154
        %s156 = smul.u32 32, %s19
        %p157 = scmp.eq.s32.totalorder %s20, 0
        // Predicated region
        $region29: #{tpu_custom_call.1} parent=23 // pred_check
          %p158 = pneg %p157
        $region30: #{tpu_custom_call.1} parent=23 // pred_check_branch
          %160 = sbr.rel (%p158) target = $region32
        $region31: #{tpu_custom_call.1} parent=23 // pred_region
          %161 = vst [vmem:[#allocation2] sm:$0xff] 0.0
          %162 = vst [vmem:[#allocation2 + $0x8] sm:$0xff] 0.0
          %163 = vst [vmem:[#allocation2 + $0x10] sm:$0xff] 0.0
          %164 = vst [vmem:[#allocation2 + $0x18] sm:$0xff] 0.0
          %165 = vst [vmem:[#allocation2 + $0x20] sm:$0xff] 0.0
          %166 = vst [vmem:[#allocation2 + $0x28] sm:$0xff] 0.0
          %167 = vst [vmem:[#allocation2 + $0x30] sm:$0xff] 0.0
          %168 = vst [vmem:[#allocation2 + $0x38] sm:$0xff] 0.0
          %169 = vst [vmem:[#allocation2 + $0x40] sm:$0xff] 0.0
          %170 = vst [vmem:[#allocation2 + $0x48] sm:$0xff] 0.0
          %171 = vst [vmem:[#allocation2 + $0x50] sm:$0xff] 0.0
          %172 = vst [vmem:[#allocation2 + $0x58] sm:$0xff] 0.0
          %173 = vst [vmem:[#allocation2 + $0x60] sm:$0xff] 0.0
          %174 = vst [vmem:[#allocation2 + $0x68] sm:$0xff] 0.0
          %175 = vst [vmem:[#allocation2 + $0x70] sm:$0xff] 0.0
          %176 = vst [vmem:[#allocation2 + $0x78] sm:$0xff] 0.0
          %177 = vst [vmem:[#allocation2 + $0x80] sm:$0xff] 0.0
          %178 = vst [vmem:[#allocation2 + $0x88] sm:$0xff] 0.0
          %179 = vst [vmem:[#allocation2 + $0x90] sm:$0xff] 0.0
          %180 = vst [vmem:[#allocation2 + $0x98] sm:$0xff] 0.0
          %181 = vst [vmem:[#allocation2 + $0xa0] sm:$0xff] 0.0
          %182 = vst [vmem:[#allocation2 + $0xa8] sm:$0xff] 0.0
          %183 = vst [vmem:[#allocation2 + $0xb0] sm:$0xff] 0.0
          %184 = vst [vmem:[#allocation2 + $0xb8] sm:$0xff] 0.0
          %185 = vst [vmem:[#allocation2 + $0xc0] sm:$0xff] 0.0
          %186 = vst [vmem:[#allocation2 + $0xc8] sm:$0xff] 0.0
          %187 = vst [vmem:[#allocation2 + $0xd0] sm:$0xff] 0.0
          %188 = vst [vmem:[#allocation2 + $0xd8] sm:$0xff] 0.0
          %189 = vst [vmem:[#allocation2 + $0xe0] sm:$0xff] 0.0
          %190 = vst [vmem:[#allocation2 + $0xe8] sm:$0xff] 0.0
          %191 = vst [vmem:[#allocation2 + $0xf0] sm:$0xff] 0.0
          %192 = vst [vmem:[#allocation2 + $0xf8] sm:$0xff] 0.0
        $region32: #{tpu_custom_call.1} parent=23 // pred_fallthru
          _
        %v193 = vld [vmem:[%s130] sm:$0xff]
        %v194 = vld [vmem:[%s130 + $0x8] sm:$0xff]
        %v195 = vld [vmem:[%s130 + $0x10] sm:$0xff]
        %v196 = vld [vmem:[%s130 + $0x18] sm:$0xff]
        %v197 = vld [vmem:[%s130 + $0x20] sm:$0xff]
        %v198 = vld [vmem:[%s130 + $0x28] sm:$0xff]
        %v199 = vld [vmem:[%s130 + $0x30] sm:$0xff]
        %v200 = vld [vmem:[%s130 + $0x38] sm:$0xff]
        %v201 = vld [vmem:[%s130 + $0x40] sm:$0xff]
        %v202 = vld [vmem:[%s130 + $0x48] sm:$0xff]
        %v203 = vld [vmem:[%s130 + $0x50] sm:$0xff]
        %v204 = vld [vmem:[%s130 + $0x58] sm:$0xff]
        %v205 = vld [vmem:[%s130 + $0x60] sm:$0xff]
        %v206 = vld [vmem:[%s130 + $0x68] sm:$0xff]
        %v207 = vld [vmem:[%s130 + $0x70] sm:$0xff]
        %v208 = vld [vmem:[%s130 + $0x78] sm:$0xff]
        %v209 = vld [vmem:[%s130 + $0x80] sm:$0xff]
        %v210 = vld [vmem:[%s130 + $0x88] sm:$0xff]
        %v211 = vld [vmem:[%s130 + $0x90] sm:$0xff]
        %v212 = vld [vmem:[%s130 + $0x98] sm:$0xff]
        %v213 = vld [vmem:[%s130 + $0xa0] sm:$0xff]
        %v214 = vld [vmem:[%s130 + $0xa8] sm:$0xff]
        %v215 = vld [vmem:[%s130 + $0xb0] sm:$0xff]
        %v216 = vld [vmem:[%s130 + $0xb8] sm:$0xff]
        %v217 = vld [vmem:[%s130 + $0xc0] sm:$0xff]
        %v218 = vld [vmem:[%s130 + $0xc8] sm:$0xff]
        %v219 = vld [vmem:[%s130 + $0xd0] sm:$0xff]
        %v220 = vld [vmem:[%s130 + $0xd8] sm:$0xff]
        %v221 = vld [vmem:[%s130 + $0xe0] sm:$0xff]
        %v222 = vld [vmem:[%s130 + $0xe8] sm:$0xff]
        %v223 = vld [vmem:[%s130 + $0xf0] sm:$0xff]
        %v224 = vld [vmem:[%s130 + $0xf8] sm:$0xff]
        %v225 = vld [vmem:[%s130 + $0x100] sm:$0xff]
        %v226 = vld [vmem:[%s130 + $0x108] sm:$0xff]
        %v227 = vld [vmem:[%s130 + $0x110] sm:$0xff]
        %v228 = vld [vmem:[%s130 + $0x118] sm:$0xff]
        %v229 = vld [vmem:[%s130 + $0x120] sm:$0xff]
        %v230 = vld [vmem:[%s130 + $0x128] sm:$0xff]
        %v231 = vld [vmem:[%s130 + $0x130] sm:$0xff]
        %v232 = vld [vmem:[%s130 + $0x138] sm:$0xff]
        %v233 = vld [vmem:[%s130 + $0x140] sm:$0xff]
        %v234 = vld [vmem:[%s130 + $0x148] sm:$0xff]
        %v235 = vld [vmem:[%s130 + $0x150] sm:$0xff]
        %v236 = vld [vmem:[%s130 + $0x158] sm:$0xff]
        %v237 = vld [vmem:[%s130 + $0x160] sm:$0xff]
        %v238 = vld [vmem:[%s130 + $0x168] sm:$0xff]
        %v239 = vld [vmem:[%s130 + $0x170] sm:$0xff]
        %v240 = vld [vmem:[%s130 + $0x178] sm:$0xff]
        %v241 = vld [vmem:[%s130 + $0x180] sm:$0xff]
        %v242 = vld [vmem:[%s130 + $0x188] sm:$0xff]
        %v243 = vld [vmem:[%s130 + $0x190] sm:$0xff]
        %v244 = vld [vmem:[%s130 + $0x198] sm:$0xff]
        %v245 = vld [vmem:[%s130 + $0x1a0] sm:$0xff]
        %v246 = vld [vmem:[%s130 + $0x1a8] sm:$0xff]
        %v247 = vld [vmem:[%s130 + $0x1b0] sm:$0xff]
        %v248 = vld [vmem:[%s130 + $0x1b8] sm:$0xff]
        %v249 = vld [vmem:[%s130 + $0x1c0] sm:$0xff]
        %v250 = vld [vmem:[%s130 + $0x1c8] sm:$0xff]
        %v251 = vld [vmem:[%s130 + $0x1d0] sm:$0xff]
        %v252 = vld [vmem:[%s130 + $0x1d8] sm:$0xff]
        %v253 = vld [vmem:[%s130 + $0x1e0] sm:$0xff]
        %v254 = vld [vmem:[%s130 + $0x1e8] sm:$0xff]
        %v255 = vld [vmem:[%s130 + $0x1f0] sm:$0xff]
        %v256 = vld [vmem:[%s130 + $0x1f8] sm:$0xff]
        %v257 = vadd.f32 %v193, %v194
        %v258 = vadd.f32 %v195, %v196
        %v259 = vadd.f32 %v197, %v198
        %v260 = vadd.f32 %v199, %v200
        %v261 = vadd.f32 %v201, %v202
        %v262 = vadd.f32 %v203, %v204
        %v263 = vadd.f32 %v205, %v206
        %v264 = vadd.f32 %v207, %v208
        %v265 = vadd.f32 %v209, %v210
        %v266 = vadd.f32 %v211, %v212
        %v267 = vadd.f32 %v213, %v214
        %v268 = vadd.f32 %v215, %v216
        %v269 = vadd.f32 %v217, %v218
        %v270 = vadd.f32 %v219, %v220
        %v271 = vadd.f32 %v221, %v222
        %v272 = vadd.f32 %v223, %v224
        %v273 = vadd.f32 %v225, %v226
        %v274 = vadd.f32 %v227, %v228
        %v275 = vadd.f32 %v229, %v230
        %v276 = vadd.f32 %v231, %v232
        %v277 = vadd.f32 %v233, %v234
        %v278 = vadd.f32 %v235, %v236
        %v279 = vadd.f32 %v237, %v238
        %v280 = vadd.f32 %v239, %v240
        %v281 = vadd.f32 %v241, %v242
        %v282 = vadd.f32 %v243, %v244
        %v283 = vadd.f32 %v245, %v246
        %v284 = vadd.f32 %v247, %v248
        %v285 = vadd.f32 %v249, %v250
        %v286 = vadd.f32 %v251, %v252
        %v287 = vadd.f32 %v253, %v254
        %v288 = vadd.f32 %v255, %v256
        %v289 = vld [vmem:[#allocation2] sm:$0xff]
        %v290 = vld [vmem:[#allocation2 + $0x8] sm:$0xff]
        %v291 = vld [vmem:[#allocation2 + $0x10] sm:$0xff]
        %v292 = vld [vmem:[#allocation2 + $0x18] sm:$0xff]
        %v293 = vld [vmem:[#allocation2 + $0x20] sm:$0xff]
        %v294 = vld [vmem:[#allocation2 + $0x28] sm:$0xff]
        %v295 = vld [vmem:[#allocation2 + $0x30] sm:$0xff]
        %v296 = vld [vmem:[#allocation2 + $0x38] sm:$0xff]
        %v297 = vld [vmem:[#allocation2 + $0x40] sm:$0xff]
        %v298 = vld [vmem:[#allocation2 + $0x48] sm:$0xff]
        %v299 = vld [vmem:[#allocation2 + $0x50] sm:$0xff]
        %v300 = vld [vmem:[#allocation2 + $0x58] sm:$0xff]
        %v301 = vld [vmem:[#allocation2 + $0x60] sm:$0xff]
        %v302 = vld [vmem:[#allocation2 + $0x68] sm:$0xff]
        %v303 = vld [vmem:[#allocation2 + $0x70] sm:$0xff]
        %v304 = vld [vmem:[#allocation2 + $0x78] sm:$0xff]
        %v305 = vld [vmem:[#allocation2 + $0x80] sm:$0xff]
        %v306 = vld [vmem:[#allocation2 + $0x88] sm:$0xff]
        %v307 = vld [vmem:[#allocation2 + $0x90] sm:$0xff]
        %v308 = vld [vmem:[#allocation2 + $0x98] sm:$0xff]
        %v309 = vld [vmem:[#allocation2 + $0xa0] sm:$0xff]
        %v310 = vld [vmem:[#allocation2 + $0xa8] sm:$0xff]
        %v311 = vld [vmem:[#allocation2 + $0xb0] sm:$0xff]
        %v312 = vld [vmem:[#allocation2 + $0xb8] sm:$0xff]
        %v313 = vld [vmem:[#allocation2 + $0xc0] sm:$0xff]
        %v314 = vld [vmem:[#allocation2 + $0xc8] sm:$0xff]
        %v315 = vld [vmem:[#allocation2 + $0xd0] sm:$0xff]
        %v316 = vld [vmem:[#allocation2 + $0xd8] sm:$0xff]
        %v317 = vld [vmem:[#allocation2 + $0xe0] sm:$0xff]
        %v318 = vld [vmem:[#allocation2 + $0xe8] sm:$0xff]
        %v319 = vld [vmem:[#allocation2 + $0xf0] sm:$0xff]
        %v320 = vld [vmem:[#allocation2 + $0xf8] sm:$0xff]
        %v321 = vadd.f32 %v289, %v257
        %v322 = vadd.f32 %v290, %v258
        %v323 = vadd.f32 %v291, %v259
        %v324 = vadd.f32 %v292, %v260
        %v325 = vadd.f32 %v293, %v261
        %v326 = vadd.f32 %v294, %v262
        %v327 = vadd.f32 %v295, %v263
        %v328 = vadd.f32 %v296, %v264
        %v329 = vadd.f32 %v297, %v265
        %v330 = vadd.f32 %v298, %v266
        %v331 = vadd.f32 %v299, %v267
        %v332 = vadd.f32 %v300, %v268
        %v333 = vadd.f32 %v301, %v269
        %v334 = vadd.f32 %v302, %v270
        %v335 = vadd.f32 %v303, %v271
        %v336 = vadd.f32 %v304, %v272
        %v337 = vadd.f32 %v305, %v273
        %v338 = vadd.f32 %v306, %v274
        %v339 = vadd.f32 %v307, %v275
        %v340 = vadd.f32 %v308, %v276
        %v341 = vadd.f32 %v309, %v277
        %v342 = vadd.f32 %v310, %v278
        %v343 = vadd.f32 %v311, %v279
        %v344 = vadd.f32 %v312, %v280
        %v345 = vadd.f32 %v313, %v281
        %v346 = vadd.f32 %v314, %v282
        %v347 = vadd.f32 %v315, %v283
        %v348 = vadd.f32 %v316, %v284
        %v349 = vadd.f32 %v317, %v285
        %v350 = vadd.f32 %v318, %v286
        %v351 = vadd.f32 %v319, %v287
        %v352 = vadd.f32 %v320, %v288
        %353 = vst [vmem:[#allocation2] sm:$0xff] %v321
        %354 = vst [vmem:[#allocation2 + $0x8] sm:$0xff] %v322
        %355 = vst [vmem:[#allocation2 + $0x10] sm:$0xff] %v323
        %356 = vst [vmem:[#allocation2 + $0x18] sm:$0xff] %v324
        %357 = vst [vmem:[#allocation2 + $0x20] sm:$0xff] %v325
        %358 = vst [vmem:[#allocation2 + $0x28] sm:$0xff] %v326
        %359 = vst [vmem:[#allocation2 + $0x30] sm:$0xff] %v327
        %360 = vst [vmem:[#allocation2 + $0x38] sm:$0xff] %v328
        %361 = vst [vmem:[#allocation2 + $0x40] sm:$0xff] %v329
        %362 = vst [vmem:[#allocation2 + $0x48] sm:$0xff] %v330
        %363 = vst [vmem:[#allocation2 + $0x50] sm:$0xff] %v331
        %364 = vst [vmem:[#allocation2 + $0x58] sm:$0xff] %v332
        %365 = vst [vmem:[#allocation2 + $0x60] sm:$0xff] %v333
        %366 = vst [vmem:[#allocation2 + $0x68] sm:$0xff] %v334
        %367 = vst [vmem:[#allocation2 + $0x70] sm:$0xff] %v335
        %368 = vst [vmem:[#allocation2 + $0x78] sm:$0xff] %v336
        %369 = vst [vmem:[#allocation2 + $0x80] sm:$0xff] %v337
        %370 = vst [vmem:[#allocation2 + $0x88] sm:$0xff] %v338
        %371 = vst [vmem:[#allocation2 + $0x90] sm:$0xff] %v339
        %372 = vst [vmem:[#allocation2 + $0x98] sm:$0xff] %v340
        %373 = vst [vmem:[#allocation2 + $0xa0] sm:$0xff] %v341
        %374 = vst [vmem:[#allocation2 + $0xa8] sm:$0xff] %v342
        %375 = vst [vmem:[#allocation2 + $0xb0] sm:$0xff] %v343
        %376 = vst [vmem:[#allocation2 + $0xb8] sm:$0xff] %v344
        %377 = vst [vmem:[#allocation2 + $0xc0] sm:$0xff] %v345
        %378 = vst [vmem:[#allocation2 + $0xc8] sm:$0xff] %v346
        %379 = vst [vmem:[#allocation2 + $0xd0] sm:$0xff] %v347
        %380 = vst [vmem:[#allocation2 + $0xd8] sm:$0xff] %v348
        %381 = vst [vmem:[#allocation2 + $0xe0] sm:$0xff] %v349
        %382 = vst [vmem:[#allocation2 + $0xe8] sm:$0xff] %v350
        %383 = vst [vmem:[#allocation2 + $0xf0] sm:$0xff] %v351
        %384 = vst [vmem:[#allocation2 + $0xf8] sm:$0xff] %v352
        // Predicated region
        $region33: #{tpu_custom_call.1} parent=23 // pred_check
          %p385 = pneg %p157
        $region34: #{tpu_custom_call.1} parent=23 // pred_check_branch
          %387 = sbr.rel (%p385) target = $region36
        $region35: #{tpu_custom_call.1} parent=23 // pred_region
          %v388 = vld [vmem:[#allocation2] sm:$0xff]
          %v389 = vld [vmem:[#allocation2 + $0x8] sm:$0xff]
          %v390 = vld [vmem:[#allocation2 + $0x10] sm:$0xff]
          %v391 = vld [vmem:[#allocation2 + $0x18] sm:$0xff]
          %v392 = vld [vmem:[#allocation2 + $0x20] sm:$0xff]
          %v393 = vld [vmem:[#allocation2 + $0x28] sm:$0xff]
          %v394 = vld [vmem:[#allocation2 + $0x30] sm:$0xff]
          %v395 = vld [vmem:[#allocation2 + $0x38] sm:$0xff]
          %v396 = vld [vmem:[#allocation2 + $0x40] sm:$0xff]
          %v397 = vld [vmem:[#allocation2 + $0x48] sm:$0xff]
          %v398 = vld [vmem:[#allocation2 + $0x50] sm:$0xff]
          %v399 = vld [vmem:[#allocation2 + $0x58] sm:$0xff]
          %v400 = vld [vmem:[#allocation2 + $0x60] sm:$0xff]
          %v401 = vld [vmem:[#allocation2 + $0x68] sm:$0xff]
          %v402 = vld [vmem:[#allocation2 + $0x70] sm:$0xff]
          %v403 = vld [vmem:[#allocation2 + $0x78] sm:$0xff]
          %v404 = vld [vmem:[#allocation2 + $0x80] sm:$0xff]
          %v405 = vld [vmem:[#allocation2 + $0x88] sm:$0xff]
          %v406 = vld [vmem:[#allocation2 + $0x90] sm:$0xff]
          %v407 = vld [vmem:[#allocation2 + $0x98] sm:$0xff]
          %v408 = vld [vmem:[#allocation2 + $0xa0] sm:$0xff]
          %v409 = vld [vmem:[#allocation2 + $0xa8] sm:$0xff]
          %v410 = vld [vmem:[#allocation2 + $0xb0] sm:$0xff]
          %v411 = vld [vmem:[#allocation2 + $0xb8] sm:$0xff]
          %v412 = vld [vmem:[#allocation2 + $0xc0] sm:$0xff]
          %v413 = vld [vmem:[#allocation2 + $0xc8] sm:$0xff]
          %v414 = vld [vmem:[#allocation2 + $0xd0] sm:$0xff]
          %v415 = vld [vmem:[#allocation2 + $0xd8] sm:$0xff]
          %v416 = vld [vmem:[#allocation2 + $0xe0] sm:$0xff]
          %v417 = vld [vmem:[#allocation2 + $0xe8] sm:$0xff]
          %v418 = vld [vmem:[#allocation2 + $0xf0] sm:$0xff]
          %v419 = vld [vmem:[#allocation2 + $0xf8] sm:$0xff]
          %420 = vadd.xlane.f32.xlu0 %v388
          %v421 = vpop.xlane.xlu0 %420
          %422 = vadd.xlane.f32.xlu0 %v389
          %v423 = vpop.xlane.xlu0 %422
          %424 = vadd.xlane.f32.xlu0 %v390
          %v425 = vpop.xlane.xlu0 %424
          %426 = vadd.xlane.f32.xlu0 %v391
          %v427 = vpop.xlane.xlu0 %426
          %428 = vadd.xlane.f32.xlu0 %v392
          %v429 = vpop.xlane.xlu0 %428
          %430 = vadd.xlane.f32.xlu0 %v393
          %v431 = vpop.xlane.xlu0 %430
          %432 = vadd.xlane.f32.xlu0 %v394
          %v433 = vpop.xlane.xlu0 %432
          %434 = vadd.xlane.f32.xlu0 %v395
          %v435 = vpop.xlane.xlu0 %434
          %436 = vadd.xlane.f32.xlu0 %v396
          %v437 = vpop.xlane.xlu0 %436
          %438 = vadd.xlane.f32.xlu0 %v397
          %v439 = vpop.xlane.xlu0 %438
          %440 = vadd.xlane.f32.xlu0 %v398
          %v441 = vpop.xlane.xlu0 %440
          %442 = vadd.xlane.f32.xlu0 %v399
          %v443 = vpop.xlane.xlu0 %442
          %444 = vadd.xlane.f32.xlu0 %v400
          %v445 = vpop.xlane.xlu0 %444
          %446 = vadd.xlane.f32.xlu0 %v401
          %v447 = vpop.xlane.xlu0 %446
          %448 = vadd.xlane.f32.xlu0 %v402
          %v449 = vpop.xlane.xlu0 %448
          %450 = vadd.xlane.f32.xlu0 %v403
          %v451 = vpop.xlane.xlu0 %450
          %452 = vadd.xlane.f32.xlu0 %v404
          %v453 = vpop.xlane.xlu0 %452
          %454 = vadd.xlane.f32.xlu0 %v405
          %v455 = vpop.xlane.xlu0 %454
          %456 = vadd.xlane.f32.xlu0 %v406
          %v457 = vpop.xlane.xlu0 %456
          %458 = vadd.xlane.f32.xlu0 %v407
          %v459 = vpop.xlane.xlu0 %458
          %460 = vadd.xlane.f32.xlu0 %v408
          %v461 = vpop.xlane.xlu0 %460
          %462 = vadd.xlane.f32.xlu0 %v409
          %v463 = vpop.xlane.xlu0 %462
          %464 = vadd.xlane.f32.xlu0 %v410
          %v465 = vpop.xlane.xlu0 %464
          %466 = vadd.xlane.f32.xlu0 %v411
          %v467 = vpop.xlane.xlu0 %466
          %468 = vadd.xlane.f32.xlu0 %v412
          %v469 = vpop.xlane.xlu0 %468
          %470 = vadd.xlane.f32.xlu0 %v413
          %v471 = vpop.xlane.xlu0 %470
          %472 = vadd.xlane.f32.xlu0 %v414
          %v473 = vpop.xlane.xlu0 %472
          %474 = vadd.xlane.f32.xlu0 %v415
          %v475 = vpop.xlane.xlu0 %474
          %476 = vadd.xlane.f32.xlu0 %v416
          %v477 = vpop.xlane.xlu0 %476
          %478 = vadd.xlane.f32.xlu0 %v417
          %v479 = vpop.xlane.xlu0 %478
          %480 = vadd.xlane.f32.xlu0 %v418
          %v481 = vpop.xlane.xlu0 %480
          %482 = vadd.xlane.f32.xlu0 %v419
          %v483 = vpop.xlane.xlu0 %482
          %v484 = vmul.f32 %v421, 0.00390625
          %v485 = vmul.f32 %v423, 0.00390625
          %v486 = vmul.f32 %v425, 0.00390625
          %v487 = vmul.f32 %v427, 0.00390625
          %v488 = vmul.f32 %v429, 0.00390625
          %v489 = vmul.f32 %v431, 0.00390625
          %v490 = vmul.f32 %v433, 0.00390625
          %v491 = vmul.f32 %v435, 0.00390625
          %v492 = vmul.f32 %v437, 0.00390625
          %v493 = vmul.f32 %v439, 0.00390625
          %v494 = vmul.f32 %v441, 0.00390625
          %v495 = vmul.f32 %v443, 0.00390625
          %v496 = vmul.f32 %v445, 0.00390625
          %v497 = vmul.f32 %v447, 0.00390625
          %v498 = vmul.f32 %v449, 0.00390625
          %v499 = vmul.f32 %v451, 0.00390625
          %v500 = vmul.f32 %v453, 0.00390625
          %v501 = vmul.f32 %v455, 0.00390625
          %v502 = vmul.f32 %v457, 0.00390625
          %v503 = vmul.f32 %v459, 0.00390625
          %v504 = vmul.f32 %v461, 0.00390625
          %v505 = vmul.f32 %v463, 0.00390625
          %v506 = vmul.f32 %v465, 0.00390625
          %v507 = vmul.f32 %v467, 0.00390625
          %v508 = vmul.f32 %v469, 0.00390625
          %v509 = vmul.f32 %v471, 0.00390625
          %v510 = vmul.f32 %v473, 0.00390625
          %v511 = vmul.f32 %v475, 0.00390625
          %v512 = vmul.f32 %v477, 0.00390625
          %v513 = vmul.f32 %v479, 0.00390625
          %v514 = vmul.f32 %v481, 0.00390625
          %v515 = vmul.f32 %v483, 0.00390625
          %vm516 = vcmask 7168
          %517 = vst.msk [vmem:[%s155] sm:$0xff] %vm516, %v484
          %518 = vst.msk [vmem:[%s155 + $0x8] sm:$0xff] %vm516, %v485
          %519 = vst.msk [vmem:[%s155 + $0x10] sm:$0xff] %vm516, %v486
          %520 = vst.msk [vmem:[%s155 + $0x18] sm:$0xff] %vm516, %v487
          %521 = vst.msk [vmem:[%s155 + $0x20] sm:$0xff] %vm516, %v488
          %522 = vst.msk [vmem:[%s155 + $0x28] sm:$0xff] %vm516, %v489
          %523 = vst.msk [vmem:[%s155 + $0x30] sm:$0xff] %vm516, %v490
          %524 = vst.msk [vmem:[%s155 + $0x38] sm:$0xff] %vm516, %v491
          %525 = vst.msk [vmem:[%s155 + $0x40] sm:$0xff] %vm516, %v492
          %526 = vst.msk [vmem:[%s155 + $0x48] sm:$0xff] %vm516, %v493
          %527 = vst.msk [vmem:[%s155 + $0x50] sm:$0xff] %vm516, %v494
          %528 = vst.msk [vmem:[%s155 + $0x58] sm:$0xff] %vm516, %v495
          %529 = vst.msk [vmem:[%s155 + $0x60] sm:$0xff] %vm516, %v496
          %530 = vst.msk [vmem:[%s155 + $0x68] sm:$0xff] %vm516, %v497
          %531 = vst.msk [vmem:[%s155 + $0x70] sm:$0xff] %vm516, %v498
          %532 = vst.msk [vmem:[%s155 + $0x78] sm:$0xff] %vm516, %v499
          %533 = vst.msk [vmem:[%s155 + $0x80] sm:$0xff] %vm516, %v500
          %534 = vst.msk [vmem:[%s155 + $0x88] sm:$0xff] %vm516, %v501
          %535 = vst.msk [vmem:[%s155 + $0x90] sm:$0xff] %vm516, %v502
          %536 = vst.msk [vmem:[%s155 + $0x98] sm:$0xff] %vm516, %v503
          %537 = vst.msk [vmem:[%s155 + $0xa0] sm:$0xff] %vm516, %v504
          %538 = vst.msk [vmem:[%s155 + $0xa8] sm:$0xff] %vm516, %v505
          %539 = vst.msk [vmem:[%s155 + $0xb0] sm:$0xff] %vm516, %v506
          %540 = vst.msk [vmem:[%s155 + $0xb8] sm:$0xff] %vm516, %v507
          %541 = vst.msk [vmem:[%s155 + $0xc0] sm:$0xff] %vm516, %v508
          %542 = vst.msk [vmem:[%s155 + $0xc8] sm:$0xff] %vm516, %v509
          %543 = vst.msk [vmem:[%s155 + $0xd0] sm:$0xff] %vm516, %v510
          %544 = vst.msk [vmem:[%s155 + $0xd8] sm:$0xff] %vm516, %v511
          %545 = vst.msk [vmem:[%s155 + $0xe0] sm:$0xff] %vm516, %v512
          %546 = vst.msk [vmem:[%s155 + $0xe8] sm:$0xff] %vm516, %v513
          %547 = vst.msk [vmem:[%s155 + $0xf0] sm:$0xff] %vm516, %v514
          %548 = vst.msk [vmem:[%s155 + $0xf8] sm:$0xff] %vm516, %v515
        $region36: #{tpu_custom_call.1} parent=23 // pred_fallthru
          _
        %s549 = smul.u32 32, %s19
        %p550 = scmp.lt.s32.totalorder %s549, 63
        %s551 = scalar_select %p550, %s549, 63
        %s552 = smul.addr %s551, 8
        %s553 = scalar_lea.vmem %s1, %s552
        // Predicated region
        $region37: #{tpu_custom_call.1} parent=23 // pred_check
          %p554 = pneg %p73
        $region38: #{tpu_custom_call.1} parent=23 // pred_check_branch
          %556 = sbr.rel (%p554) target = $region40
        $region39: #{tpu_custom_call.1} parent=23 // pred_region
          %s557 = smul.u32 32, %s19
        $region40: #{tpu_custom_call.1} parent=23 // pred_fallthru
          _
      $region24: #{tpu_custom_call.1} parent=5 // pred_fallthru
        _
      %p558 = scmp.le.s32.totalorder 2, %s10
      // Predicated region
      $region41: #{tpu_custom_call.1} parent=5 // pred_check
        %p559 = pneg %p558
      $region42: #{tpu_custom_call.1} parent=5 // pred_check_branch
        %561 = sbr.rel (%p559) target = $region44
      $region43: #{tpu_custom_call.1} parent=5 // pred_region
        %s562 = ssub.s32 %s10, 2
        // Predicated region
        $region45: #{tpu_custom_call.1} parent=43 // pred_check
          %p563 = pneg %p79
        $region46: #{tpu_custom_call.1} parent=43 // pred_check_branch
          %565 = sbr.rel (%p563) target = $region48
        $region47: #{tpu_custom_call.1} parent=43 // pred_region
          %s566 = smul.u32 32, %s21
          %p567 = scmp.lt.s32.totalorder %s566, 63
          %s568 = scalar_select %p567, %s566, 63
          %s569 = smul.addr %s568, 8
          %s570 = scalar_lea.vmem %s1, %s569
        $region48: #{tpu_custom_call.1} parent=43 // pred_fallthru
          _
      $region44: #{tpu_custom_call.1} parent=5 // pred_fallthru
        _
    $region6: #{tpu_custom_call.1} parent=1 // loop_footer
      %s14 = sadd.s32 1, %s10
    $region7: #{tpu_custom_call.1} parent=1 // loop_footer_branch
      %9 = sbr.rel target = $region3
    $region8: #{tpu_custom_call.1} parent=1 // loop_exit
      _
    %571 = vsyncpa [#allocation4], 1
    %s572 = scalar_lea.sflag [#allocation4], 1
    %573 = vsyncpa %s572, 1

</llo_original>
